<compile_context>
chip_gen: v7x
topology: tpu7x:2x2x1
jax: 0.10.0
libtpu: 0.0.40
codegen_flags: <defaults>
</compile_context>

<pallas_src>
import jax
import jax.numpy as jnp
from jax.experimental import pallas as pl
from jax.experimental.pallas import tpu as pltpu


def _round_up(x, m):
    return (x + m - 1) // m * m


# ---------------------------------------------------------------------------
# Kernels
# ---------------------------------------------------------------------------
def _single_pass_kernel(x_ref, w1_ref, w2_ref, beff_ref, o_ref):
    # y = x @ W1 @ W2 + (b1 @ W2 + b2)   (bias fold; no activation in the forward)
    h = jnp.dot(x_ref[...], w1_ref[...], preferred_element_type=jnp.float32)
    y = jnp.dot(h.astype(w2_ref.dtype), w2_ref[...], preferred_element_type=jnp.float32)
    o_ref[...] = (y + beff_ref[...]).astype(o_ref.dtype)


def _reduction_kernel(x_ref, w1_ref, w2_ref, beff_ref, o_ref, acc_ref):
    # Grid: (batch tile i, hidden-reduction tile j) with j innermost ("arbitrary").
    j = pl.program_id(1)

    @pl.when(j == 0)
    def _init():
        acc_ref[...] = jnp.zeros_like(acc_ref)

    h = jnp.dot(x_ref[...], w1_ref[...], preferred_element_type=jnp.float32)
    acc_ref[...] += jnp.dot(h.astype(w2_ref.dtype), w2_ref[...],
                            preferred_element_type=jnp.float32)

    @pl.when(j == pl.num_programs(1) - 1)
    def _finalize():
        o_ref[...] = (acc_ref[...] + beff_ref[...]).astype(o_ref.dtype)


# ---------------------------------------------------------------------------
# Wrapper
# ---------------------------------------------------------------------------
def _choose_tm(N, tm_max):
    if N > tm_max:
        return tm_max                      # multiple of 8; last tile may be partial (masked)
    if N >= 256 and N % 16 == 0:
        return N // 2                      # >=2 batch tiles -> feeds both TensorCores on v7x
    return N                               # full-extent batch block (always a legal block dim)


def two_layer_net(x, w1, b1, w2, b2, *, tm_max=512, use_bf16=False,
                  vmem_budget_bytes=40 * 1024 * 1024):
    """Forward of Tut_TwoLayerNet: y = linear2(linear1(x))  (no activation).

    x:  [N, D_in]      w1: [D_in, H]   (== torch linear1.weight.T)
    b1: [H]            w2: [H, D_out]  (== torch linear2.weight.T)
    b2: [D_out]        -> [N, D_out]
    """
    N, D_in = x.shape
    H, D_out = w2.shape
    out_dtype = x.dtype

    # Fold both biases out of the kernel (valid: no activation between the layers).
    b_eff = (jnp.dot(b1, w2, precision=jax.lax.Precision.HIGHEST) + b2)
    b_eff = b_eff.astype(jnp.float32).reshape(1, D_out)

    op_dtype = jnp.bfloat16 if use_bf16 else x.dtype
    x_op = x.astype(op_dtype)
    w1_op = w1.astype(op_dtype)
    w2_op = w2.astype(op_dtype)
    in_sz = jnp.dtype(op_dtype).itemsize
    out_sz = jnp.dtype(out_dtype).itemsize

    tm_max = max(8, (tm_max // 8) * 8)
    tm = _choose_tm(N, tm_max)
    n_tiles = pl.cdiv(N, tm)

    w_bytes = (D_in * H + H * D_out) * in_sz
    single_pass_est = (2 * w_bytes                      # weights (count double-buffers)
                       + 2 * tm * D_in * in_sz          # x tile double buffer
                       + 2 * tm * D_out * out_sz        # output tile double buffer
                       + 2 * D_out * 4)                 # folded bias

    if single_pass_est <= vmem_budget_bytes:
        # ---- Single-pass path: weights fully VMEM-resident, 1-D grid over batch. ----
        vmem_limit = min(max(int(single_pass_est * 3 // 2) + (1 << 20), 16 << 20), 60 << 20)
        return pl.pallas_call(
            _single_pass_kernel,
            out_shape=jax.ShapeDtypeStruct((N, D_out), out_dtype),
            grid_spec=pltpu.PrefetchScalarGridSpec(
                num_scalar_prefetch=0,
                grid=(n_tiles,),
                in_specs=[
                    pl.BlockSpec((tm, D_in), lambda i: (i, 0)),     # x streams (only tiled op)
                    pl.BlockSpec((D_in, H), lambda i: (0, 0)),      # W1 resident (DMA'd once)
                    pl.BlockSpec((H, D_out), lambda i: (0, 0)),     # W2 resident (DMA'd once)
                    pl.BlockSpec((1, D_out), lambda i: (0, 0)),     # folded bias resident
                ],
                out_specs=pl.BlockSpec((tm, D_out), lambda i: (i, 0)),
            ),
            compiler_params=pltpu.CompilerParams(
                dimension_semantics=("parallel",),
                vmem_limit_bytes=vmem_limit,
            ),
        )(x_op, w1_op, w2_op, b_eff)

    # ---- Fallback path: weights too large for VMEM -> tile H as an inner reduction axis. ----
    h_p = _round_up(H, 128)
    th = 128
    for cand in (4096, 2048, 1024, 512, 256):
        per_step = (2 * (D_in + D_out) * cand * in_sz
                    + 2 * tm * D_in * in_sz
                    + 2 * tm * D_out * out_sz
                    + tm * D_out * 4)
        if h_p % cand == 0 and per_step <= vmem_budget_bytes:
            th = cand
            break
    # Zero-pad only the hidden dim, only to the next multiple of th's tiling (<=127 extra),
    # so padded K columns/rows contribute exactly zero.
    w1_p = jnp.pad(w1_op, ((0, 0), (0, h_p - H)))
    w2_p = jnp.pad(w2_op, ((0, h_p - H), (0, 0)))

    est = (2 * (D_in + D_out) * th * in_sz + 2 * tm * D_in * in_sz
           + 2 * tm * D_out * out_sz + tm * D_out * 4 + 2 * D_out * 4)
    vmem_limit = min(max(int(est * 3 // 2) + (1 << 20), 16 << 20), 60 << 20)

    return pl.pallas_call(
        _reduction_kernel,
        out_shape=jax.ShapeDtypeStruct((N, D_out), out_dtype),
        grid_spec=pltpu.PrefetchScalarGridSpec(
            num_scalar_prefetch=0,
            grid=(n_tiles, h_p // th),
            in_specs=[
                pl.BlockSpec((tm, D_in), lambda i, j: (i, 0)),      # x tile (resident across j)
                pl.BlockSpec((D_in, th), lambda i, j: (0, j)),      # W1 H-slice
                pl.BlockSpec((th, D_out), lambda i, j: (j, 0)),     # W2 H-slice
                pl.BlockSpec((1, D_out), lambda i, j: (0, 0)),      # folded bias
            ],
            out_specs=pl.BlockSpec((tm, D_out), lambda i, j: (i, 0)),
            scratch_shapes=[pltpu.VMEM((tm, D_out), jnp.float32)],
        ),
        compiler_params=pltpu.CompilerParams(
            dimension_semantics=("parallel", "arbitrary"),
            vmem_limit_bytes=vmem_limit,
        ),
    )(x_op, w1_p, w2_p, b_eff)


# ---------------------------------------------------------------------------
# Demo / self-test
# ---------------------------------------------------------------------------
def _make_params(key, D_in, H, D_out):
    k1, k2, k3, k4 = jax.random.split(key, 4)
    bound1 = 1.0 / (D_in ** 0.5)
    bound2 = 1.0 / (H ** 0.5)
    w1 = jax.random.uniform(k1, (D_in, H), jnp.float32, -bound1, bound1)   # == torch W1.T
    b1 = jax.random.uniform(k2, (H,), jnp.float32, -bound1, bound1)
    w2 = jax.random.uniform(k3, (H, D_out), jnp.float32, -bound2, bound2)  # == torch W2.T
    b2 = jax.random.uniform(k4, (D_out,), jnp.float32, -bound2, bound2)
    return w1, b1, w2, b2


if __name__ == "__main__":
    key = jax.random.PRNGKey(0)

    # 1) Small shapes implied by the module -> single-pass path, grid=(1,), no padding anywhere.
    N, D_in, H, D_out = 8, 32, 64, 16
    kx, kp, key = jax.random.split(key, 3)
    x = jax.random.normal(kx, (N, D_in), jnp.float32)
    w1, b1, w2, b2 = _make_params(kp, D_in, H, D_out)
    y = jax.block_until_ready(two_layer_net(x, w1, b1, w2, b2))
    y_ref = (x @ w1 + b1) @ w2 + b2
    assert y.shape == (N, D_out)
    assert jnp.allclose(y, y_ref, atol=1e-4, rtol=1e-4), float(jnp.abs(y - y_ref).max())

    # 2) Larger shapes, forced onto the H-reduction fallback path (grid=(2, 2)).
    N2, D_in2, H2, D_out2 = 256, 96, 1024, 48
    kx2, kp2, key = jax.random.split(key, 3)
    x2 = jax.random.normal(kx2, (N2, D_in2), jnp.float32)
    w1b, b1b, w2b, b2b = _make_params(kp2, D_in2, H2, D_out2)
    y2 = jax.block_until_ready(
        two_layer_net(x2, w1b, b1b, w2b, b2b, vmem_budget_bytes=1 << 20))
    y2_ref = (x2 @ w1b + b1b) @ w2b + b2b
    assert y2.shape == (N2, D_out2)
    assert jnp.allclose(y2, y2_ref, atol=2e-3, rtol=1e-3), float(jnp.abs(y2 - y2_ref).max())

    # 3) Same shapes on the single-pass path with the optional bf16-operand fast path.
    y3 = jax.block_until_ready(two_layer_net(x2, w1b, b1b, w2b, b2b, use_bf16=True))
    assert y3.shape == (N2, D_out2)
    assert jnp.allclose(y3, y2_ref, atol=5e-2, rtol=5e-2), float(jnp.abs(y3 - y2_ref).max())

    print("KERNEL_OK")
</pallas_src>

<mosaic_0001>
module attributes {stable_mosaic.version = 11 : i64} {
  func.func @_single_pass_kernel(%arg0: i32, %arg1: memref<8x32xf32, #tpu.memory_space<vmem>>, %arg2: memref<32x64xf32, #tpu.memory_space<vmem>>, %arg3: memref<64x16xf32, #tpu.memory_space<vmem>>, %arg4: memref<1x16xf32, #tpu.memory_space<vmem>>, %arg5: memref<8x16xf32, #tpu.memory_space<vmem>>) attributes {dimension_semantics = [#tpu.dimension_semantics<parallel>], iteration_bounds = array<i64: 1>, scalar_prefetch = 0 : i64, scratch_operands = 0 : i64, tpu.core_type = #tpu.core_type<tc>, window_params = [{transform_indices = @transform_0, window_bounds = array<i64: 8, 32>}, {pipeline_mode = #tpu.pipeline_mode<synchronous>, transform_indices = @transform_1, window_bounds = array<i64: 32, 64>}, {pipeline_mode = #tpu.pipeline_mode<synchronous>, transform_indices = @transform_2, window_bounds = array<i64: 64, 16>}, {pipeline_mode = #tpu.pipeline_mode<synchronous>, transform_indices = @transform_3, window_bounds = array<i64: 1, 16>}, {transform_indices = @transform_4, window_bounds = array<i64: 8, 16>}]} {
    %c0 = arith.constant 0 : index
    %c0_0 = arith.constant 0 : index
    %0 = vector.load %arg1[%c0, %c0_0] : memref<8x32xf32, #tpu.memory_space<vmem>>, vector<8x32xf32>
    %c0_1 = arith.constant 0 : index
    %c0_2 = arith.constant 0 : index
    %1 = vector.load %arg2[%c0_1, %c0_2] : memref<32x64xf32, #tpu.memory_space<vmem>>, vector<32x64xf32>
    %cst = arith.constant dense<0.000000e+00> : vector<8x64xf32>
    %2 = tpu.matmul %0, %1, %cst {dimension_numbers = #tpu.dot_dimension_numbers<[1], [0], [0], [1], [0, 0, 1, 1], [], []>} : vector<8x32xf32>, vector<32x64xf32>, vector<8x64xf32> -> vector<8x64xf32>
    %c0_3 = arith.constant 0 : index
    %c0_4 = arith.constant 0 : index
    %3 = vector.load %arg3[%c0_3, %c0_4] : memref<64x16xf32, #tpu.memory_space<vmem>>, vector<64x16xf32>
    %cst_5 = arith.constant dense<0.000000e+00> : vector<8x16xf32>
    %4 = tpu.matmul %2, %3, %cst_5 {dimension_numbers = #tpu.dot_dimension_numbers<[1], [0], [0], [1], [0, 0, 1, 1], [], []>} : vector<8x64xf32>, vector<64x16xf32>, vector<8x16xf32> -> vector<8x16xf32>
    %c0_6 = arith.constant 0 : index
    %c0_7 = arith.constant 0 : index
    %5 = vector.load %arg4[%c0_6, %c0_7] : memref<1x16xf32, #tpu.memory_space<vmem>>, vector<1x16xf32>
    %6 = vector.broadcast %5 : vector<1x16xf32> to vector<8x16xf32>
    %7 = arith.addf %4, %6 : vector<8x16xf32>
    %c0_8 = arith.constant 0 : index
    %c0_9 = arith.constant 0 : index
    %8 = vector.load %arg5[%c0_8, %c0_9] : memref<8x16xf32, #tpu.memory_space<vmem>>, vector<8x16xf32>
    tpu.vector_store %arg5[%c0_8, %c0_9], %7 {strides = array<i32>} : memref<8x16xf32, #tpu.memory_space<vmem>>, vector<8x16xf32>,
    return
  }
  func.func @transform_0(%arg0: i32) -> (i32, i32) {
    %c0_i32 = arith.constant 0 : i32
    %c0_i32_0 = arith.constant 0 : i32
    return %arg0, %c0_i32 : i32, i32
  }
  func.func @transform_1(%arg0: i32) -> (i32, i32) {
    %c0_i32 = arith.constant 0 : i32
    %c0_i32_0 = arith.constant 0 : i32
    %c0_i32_1 = arith.constant 0 : i32
    return %c0_i32, %c0_i32_0 : i32, i32
  }
  func.func @transform_2(%arg0: i32) -> (i32, i32) {
    %c0_i32 = arith.constant 0 : i32
    %c0_i32_0 = arith.constant 0 : i32
    %c0_i32_1 = arith.constant 0 : i32
    return %c0_i32, %c0_i32_0 : i32, i32
  }
  func.func @transform_3(%arg0: i32) -> (i32, i32) {
    %c0_i32 = arith.constant 0 : i32
    %c0_i32_0 = arith.constant 0 : i32
    %c0_i32_1 = arith.constant 0 : i32
    return %c0_i32, %c0_i32_0 : i32, i32
  }
  func.func @transform_4(%arg0: i32) -> (i32, i32) {
    %c0_i32 = arith.constant 0 : i32
    %c0_i32_0 = arith.constant 0 : i32
    return %arg0, %c0_i32 : i32, i32
  }
}

</mosaic_0001>

<llo_original>
// kernel: tpu_custom_call.1
$region0: #{tpu_custom_call.1}
  #allocation0 [shape = 'u32[]', space=smem, size = 0x4, offset = 0x4, fixed_abs, tag = 'smem constant byte address 0x4 - core index']
  #allocation1 [shape = 'u32[144,128]{1,0:T(1,128)}', space=vmem, size = 0x12000, scoped, tag = 'internal scratch']
  %s0 = inlined_call_operand.vmem [shape: f32[8,32], index: 0, kind: input, shape index: {}]
  %s1 = inlined_call_operand.vmem [shape: f32[32,64], index: 1, kind: input, shape index: {}]
  %s2 = inlined_call_operand.vmem [shape: f32[64,16], index: 2, kind: input, shape index: {}]
  %s3 = inlined_call_operand.vmem [shape: f32[1,16], index: 3, kind: input, shape index: {}]
  %s4 = inlined_call_operand.hbm [shape: f32[8,16], index: 4, kind: output, shape index: {}]
  %s5 = sld [smem:[#allocation0]]
  $region26: #{tpu_custom_call.1} parent=0
    _
  %s7 = ssub.s32 1, %s5
  %s8 = scalar_select 0, %s7, %s5
  $region1: #{tpu_custom_call.1} parent=0
    #allocation2 [shape = 'u8[4096]{0}', space=vmem, size = 0x1000, scoped, tag = 'output window, operand 0, single buffered']
    #allocation3 [shape = 's32[1]{0}', space=sflag, size = 0x4, scoped, tag = 'scoped memory for tpu_custom_call.1']
    %9 = vsyncpa [#allocation3], 0
    // Predicated region
    $region2: #{tpu_custom_call.1} parent=1 // pred_check
      _
    $region3: #{tpu_custom_call.1} parent=1 // pred_check_branch
      %11 = sbr.rel (0) target = $region5
    $region4: #{tpu_custom_call.1} parent=1 // pred_region
      _
    $region5: #{tpu_custom_call.1} parent=1 // pred_fallthru
      _
    // Predicated region
    $region6: #{tpu_custom_call.1} parent=1 // pred_check
      _
    $region7: #{tpu_custom_call.1} parent=1 // pred_check_branch
      %13 = sbr.rel (0) target = $region9
    $region8: #{tpu_custom_call.1} parent=1 // pred_region
      _
    $region9: #{tpu_custom_call.1} parent=1 // pred_fallthru
      _
    // Predicated region
    $region10: #{tpu_custom_call.1} parent=1 // pred_check
      _
    $region11: #{tpu_custom_call.1} parent=1 // pred_check_branch
      %15 = sbr.rel (0) target = $region13
    $region12: #{tpu_custom_call.1} parent=1 // pred_region
      _
    $region13: #{tpu_custom_call.1} parent=1 // pred_fallthru
      _
    // Predicated region
    $region14: #{tpu_custom_call.1} parent=1 // pred_check
      _
    $region15: #{tpu_custom_call.1} parent=1 // pred_check_branch
      %17 = sbr.rel (0) target = $region17
    $region16: #{tpu_custom_call.1} parent=1 // pred_region
      _
    $region17: #{tpu_custom_call.1} parent=1 // pred_fallthru
      _
    %v18 = vld [vmem:[%s0] sm:$0xff]
    %v19 = vld [vmem:[%s1] sm:$0xff]
    %v20 = vld [vmem:[%s1 + $0x8] sm:$0xff]
    %v21 = vld [vmem:[%s1 + $0x10] sm:$0xff]
    %v22 = vld [vmem:[%s1 + $0x18] sm:$0xff]
    %vm23 = vcmask 261120
    %v25 = vsel %vm23, %v18, 0
    %27 = vmatprep.subr.mxu0 0.0
    %28 = vmatpush1.msra.mxu0 %v19
    %29 = vmatprep.subr.mxu0 0.0
    %30 = vmatpush1.msra.mxu0 %v20
    %31 = vmatprep.subr.mxu0 0.0
    %32 = vmatpush1.msra.mxu0 %v21
    %33 = vmatprep.subr.mxu0 0.0
    %34 = vmatpush1.msra.mxu0 %v22
    %35 = vmatprep.subr.mxu0 0.0
    %36 = vmatpush1.msra.mxu0 0.0
    %37 = vmatprep.subr.mxu0 0.0
    %38 = vmatpush1.msra.mxu0 0.0
    %39 = vmatprep.subr.mxu0 0.0
    %40 = vmatpush1.msra.mxu0 0.0
    %41 = vmatprep.subr.mxu0 0.0
    %42 = vmatpush1.msra.mxu0 0.0
    %43 = vmatprep.subr.mxu0 0.0
    %44 = vmatpush1.msra.mxu0 0.0
    %45 = vmatprep.subr.mxu0 0.0
    %46 = vmatpush1.msra.mxu0 0.0
    %47 = vmatprep.subr.mxu0 0.0
    %48 = vmatpush1.msra.mxu0 0.0
    %49 = vmatprep.subr.mxu0 0.0
    %50 = vmatpush1.msra.mxu0 0.0
    %51 = vmatprep.subr.mxu0 0.0
    %52 = vmatpush1.msra.mxu0 0.0
    %53 = vmatprep.subr.mxu0 0.0
    %54 = vmatpush1.msra.mxu0 0.0
    %55 = vmatprep.subr.mxu0 0.0
    %56 = vmatpush1.msra.mxu0 0.0
    %57 = vmatprep.subr.mxu0 0.0
    %58 = vmatpush1.msra.mxu0 0.0
    %59 = vmatprep.subr.mxu0 0.0
    %60 = vmatpush1.msra.mxu0 0.0
    %61 = vmatprep.subr.mxu0 0.0
    %62 = vmatpush1.msra.mxu0 0.0
    %63 = vmatprep.subr.mxu0 0.0
    %64 = vmatpush1.msra.mxu0 0.0
    %65 = vmatprep.subr.mxu0 0.0
    %66 = vmatpush1.msra.mxu0 0.0
    %67 = vmatprep.subr.mxu0 0.0
    %68 = vmatpush1.msra.mxu0 0.0
    %69 = vmatprep.subr.mxu0 0.0
    %70 = vmatpush1.msra.mxu0 0.0
    %71 = vmatprep.subr.mxu0 0.0
    %72 = vmatpush1.msra.mxu0 0.0
    %73 = vmatprep.subr.mxu0 0.0
    %74 = vmatpush1.msra.mxu0 0.0
    %75 = vmatprep.subr.mxu0 0.0
    %76 = vmatpush1.msra.mxu0 0.0
    %77 = vmatprep.subr.mxu0 0.0
    %78 = vmatpush1.msra.mxu0 0.0
    %79 = vmatprep.subr.mxu0 0.0
    %80 = vmatpush1.msra.mxu0 0.0
    %81 = vmatprep.subr.mxu0 0.0
    %82 = vmatpush1.msra.mxu0 0.0
    %83 = vmatprep.subr.mxu0 0.0
    %84 = vmatpush1.msra.mxu0 0.0
    %85 = vmatprep.subr.mxu0 0.0
    %86 = vmatpush1.msra.mxu0 0.0
    %87 = vmatprep.subr.mxu0 0.0
    %88 = vmatpush1.msra.mxu0 0.0
    %89 = vmatprep.subr.mxu0 0.0
    %90 = vmatpush1.msra.mxu0 0.0
    %91 = vmatprep.mubr.f32.mxu0 0.0
    %92 = vmatmul.mubr.f32.gmra.mrb[0].mxu0 %v25
    %v93 = vpop.f32.mrb[0].mxu0
    %v94 = vadd.f32 0.0, %v93
    %v95 = vpop.f32.mrb[0].mxu0
    %96 = vdwg.mxu0
    %v97 = vld [vmem:[%s2] sm:$0xff]
    %v98 = vld [vmem:[%s2 + $0x8] sm:$0xff]
    %v99 = vld [vmem:[%s2 + $0x10] sm:$0xff]
    %v100 = vld [vmem:[%s2 + $0x18] sm:$0xff]
    %v101 = vld [vmem:[%s2 + $0x20] sm:$0xff]
    %v102 = vld [vmem:[%s2 + $0x28] sm:$0xff]
    %v103 = vld [vmem:[%s2 + $0x30] sm:$0xff]
    %v104 = vld [vmem:[%s2 + $0x38] sm:$0xff]
    %v105 = vld [vmem:[%s3] sm:$0x1]
    %v107 = vlaneseq
    %v108 = vshrl.u32 %v107, 7
    %v109 = vsub.s32 0, %v108
    %v110 = vrot.slane %v105, %v109
    %vm112 = vcmask 523264
    %v114 = vsel %vm112, %v94, 0
    %116 = vmatprep.subr.mxu0 0.0
    %117 = vmatpush1.msra.mxu0 %v97
    %118 = vmatprep.subr.mxu0 0.0
    %119 = vmatpush1.msra.mxu0 %v98
    %120 = vmatprep.subr.mxu0 0.0
    %121 = vmatpush1.msra.mxu0 %v99
    %122 = vmatprep.subr.mxu0 0.0
    %123 = vmatpush1.msra.mxu0 %v100
    %124 = vmatprep.subr.mxu0 0.0
    %125 = vmatpush1.msra.mxu0 %v101
    %126 = vmatprep.subr.mxu0 0.0
    %127 = vmatpush1.msra.mxu0 %v102
    %128 = vmatprep.subr.mxu0 0.0
    %129 = vmatpush1.msra.mxu0 %v103
    %130 = vmatprep.subr.mxu0 0.0
    %131 = vmatpush1.msra.mxu0 %v104
    %132 = vmatprep.subr.mxu0 0.0
    %133 = vmatpush1.msra.mxu0 0.0
    %134 = vmatprep.subr.mxu0 0.0
    %135 = vmatpush1.msra.mxu0 0.0
    %136 = vmatprep.subr.mxu0 0.0
    %137 = vmatpush1.msra.mxu0 0.0
    %138 = vmatprep.subr.mxu0 0.0
    %139 = vmatpush1.msra.mxu0 0.0
    %140 = vmatprep.subr.mxu0 0.0
    %141 = vmatpush1.msra.mxu0 0.0
    %142 = vmatprep.subr.mxu0 0.0
    %143 = vmatpush1.msra.mxu0 0.0
    %144 = vmatprep.subr.mxu0 0.0
    %145 = vmatpush1.msra.mxu0 0.0
    %146 = vmatprep.subr.mxu0 0.0
    %147 = vmatpush1.msra.mxu0 0.0
    %148 = vmatprep.subr.mxu0 0.0
    %149 = vmatpush1.msra.mxu0 0.0
    %150 = vmatprep.subr.mxu0 0.0
    %151 = vmatpush1.msra.mxu0 0.0
    %152 = vmatprep.subr.mxu0 0.0
    %153 = vmatpush1.msra.mxu0 0.0
    %154 = vmatprep.subr.mxu0 0.0
    %155 = vmatpush1.msra.mxu0 0.0
    %156 = vmatprep.subr.mxu0 0.0
    %157 = vmatpush1.msra.mxu0 0.0
    %158 = vmatprep.subr.mxu0 0.0
    %159 = vmatpush1.msra.mxu0 0.0
    %160 = vmatprep.subr.mxu0 0.0
    %161 = vmatpush1.msra.mxu0 0.0
    %162 = vmatprep.subr.mxu0 0.0
    %163 = vmatpush1.msra.mxu0 0.0
    %164 = vmatprep.subr.mxu0 0.0
    %165 = vmatpush1.msra.mxu0 0.0
    %166 = vmatprep.subr.mxu0 0.0
    %167 = vmatpush1.msra.mxu0 0.0
    %168 = vmatprep.subr.mxu0 0.0
    %169 = vmatpush1.msra.mxu0 0.0
    %170 = vmatprep.subr.mxu0 0.0
    %171 = vmatpush1.msra.mxu0 0.0
    %172 = vmatprep.subr.mxu0 0.0
    %173 = vmatpush1.msra.mxu0 0.0
    %174 = vmatprep.subr.mxu0 0.0
    %175 = vmatpush1.msra.mxu0 0.0
    %176 = vmatprep.subr.mxu0 0.0
    %177 = vmatpush1.msra.mxu0 0.0
    %178 = vmatprep.subr.mxu0 0.0
    %179 = vmatpush1.msra.mxu0 0.0
    %180 = vmatprep.mubr.f32.mxu0 0.0
    %181 = vmatmul.mubr.f32.gmra.mrb[0].mxu0 %v114
    %v182 = vpop.f32.mrb[0].mxu0
    %v183 = vadd.f32 %v110, %v182
    %v184 = vpop.f32.mrb[0].mxu0
    %185 = vdwg.mxu0
    %vm186 = vcmask 130048
    %187 = vst.msk [vmem:[#allocation2] sm:$0xff] %vm186, %v183
    // Predicated region
    $region18: #{tpu_custom_call.1} parent=1 // pred_check
      _
    $region19: #{tpu_custom_call.1} parent=1 // pred_check_branch
      %189 = sbr.rel (0) target = $region21
    $region20: #{tpu_custom_call.1} parent=1 // pred_region
      %s191 = ssub.s32 128, 128
      %192 = vsyncadd [#allocation3], %s191
      %s194 = sshll.u32 [#allocation2], 4
      %s195 = int_to_ptr.vmem [resolvable:$true] %s194
      %197 = dma.vmem_to_hbm [thread:$0]  %s195, 128, %s4, [#allocation3]
    $region21: #{tpu_custom_call.1} parent=1 // pred_fallthru
      _
    // Predicated region
    $region22: #{tpu_custom_call.1} parent=1 // pred_check
      _
    $region23: #{tpu_custom_call.1} parent=1 // pred_check_branch
      %199 = sbr.rel (0) target = $region25
    $region24: #{tpu_custom_call.1} parent=1 // pred_region
      %200 = dma.done [#allocation3], 128
    $region25: #{tpu_custom_call.1} parent=1 // pred_fallthru
      _
    %201 = vsyncpa [#allocation3], 1

</llo_original>
